<compile_context>
chip_gen: v5e
topology: v5e:2x2
jax: 0.10.0
libtpu: 0.0.40
codegen_flags: <defaults>
</compile_context>

<pallas_src>
import functools
from typing import NamedTuple

import jax
import jax.numpy as jnp
from jax.experimental import pallas as pl
from jax.experimental.pallas import tpu as pltpu


_LANE = 128            # lane width: feature dims padded to a multiple of this
_SUBLANE = 8           # f32 sublane count: batch padded to a multiple of this
_MAX_BATCH_TILE = 1024 # diminishing returns beyond ~512-1024 rows


def _round_up(n, m):
    return ((n + m - 1) // m) * m


def _pad_dim(d):
    # Lane-dense padding.  Wide layers get padded to the 256-wide MXU tile
    # (v6e/v7x MXUs are 2x256^2); narrow layers stay at 128.
    m = 256 if d >= 256 else _LANE
    return _round_up(max(int(d), 1), m)


def _vmem_budget_bytes():
    # ~85% of the per-core VMEM capacity (128 MiB on v5e/v6e, 64 MiB on v7x).
    try:
        cap = int(pltpu.get_tpu_info().vmem_capacity_bytes)
    except Exception:
        cap = 64 * 1024 * 1024   # conservative: assume v7x if the query fails
    return int(0.85 * cap)


_NON_LINEARITIES = {
    "relu": lambda y: jnp.maximum(y, 0.0),
    "softplus": jax.nn.softplus,
    "tanh": jnp.tanh,
}
# TODO(synk): the PyTorch module takes an arbitrary non_linear_layer module;
# only the standard elementwise activations above are implemented here.


class PreparedMLP(NamedTuple):
    ws: tuple          # per-layer zero-padded weights, compute dtype
    bs: tuple          # per-layer zero-padded (1, Np) biases, epilogue dtype
    dims: tuple        # true feature sizes [in, o1, ..., oL]
    dims_pad: tuple    # lane-padded feature sizes
    compute_dtype: object
    epilogue_dtype: object


def prepare_mlp_params(params, compute_dtype=jnp.float32, epilogue_dtype=None):
    """Pad the nn.Linear parameters ONCE (hoisted out of the forward path).

    compute_dtype:  MXU input dtype (f32 or bf16; accumulation is always f32).
    epilogue_dtype: dtype of the bias-add / non-linearity / inter-layer
      activation.  Defaults to bf16 when compute_dtype is bf16 (good on
      v6e/v7x which have a bf16 VPU); pass jnp.float32 explicitly on v5e.
    """
    assert len(params) >= 1
    compute_dtype = jnp.dtype(compute_dtype)
    if epilogue_dtype is None:
        epilogue_dtype = (jnp.dtype(jnp.bfloat16)
                          if compute_dtype == jnp.dtype(jnp.bfloat16)
                          else jnp.dtype(jnp.float32))
    epilogue_dtype = jnp.dtype(epilogue_dtype)

    dims = [int(params[0][0].shape[0])] + [int(w.shape[1]) for w, _ in params]
    dims_pad = [_pad_dim(d) for d in dims]

    ws, bs = [], []
    for l, (w, b) in enumerate(params):
        kp, np_ = dims_pad[l], dims_pad[l + 1]
        wp = (jnp.zeros((kp, np_), jnp.float32)
              .at[: w.shape[0], : w.shape[1]].set(w.astype(jnp.float32))
              .astype(compute_dtype))
        bp = (jnp.zeros((1, np_), jnp.float32)
              .at[0, : b.shape[0]].set(b.astype(jnp.float32))
              .astype(epilogue_dtype))
        ws.append(wp)
        bs.append(bp)
    return PreparedMLP(tuple(ws), tuple(bs), tuple(dims), tuple(dims_pad),
                       compute_dtype, epilogue_dtype)


def _fused_mlp_kernel(*refs, n_layers, output_non_linearity, epilogue_dtype,
                      non_linearity_fn):
    """Whole MLP in one invocation; activations never leave VMEM.

    refs = (x, w_0..w_{L-1}, b_0..b_{L-1}, out)
      x   : (TB, Kp_0)      activation tile
      w_l : (Kp_l, Np_l)    zero-padded layer weight (compute dtype)
      b_l : (1, Np_l)       zero-padded layer bias (epilogue dtype)
      out : (TB, Np_{L-1})  output tile
    Zero padding is numerically exact: padded activation columns only ever
    multiply zero-padded weight rows, so real outputs are unaffected.
    """
    x_ref, o_ref = refs[0], refs[-1]
    w_refs = refs[1:1 + n_layers]
    b_refs = refs[1 + n_layers:1 + 2 * n_layers]

    # TODO(synk): for very deep MLPs switch to a homogeneous stacked weight
    # array + lax.fori_loop (bounds live ranges / avoids spills); at typical
    # L<=8 the static unroll with per-layer padded shapes is smaller & faster.
    h = x_ref[...]
    for l in range(n_layers):
        w = w_refs[l][...]
        y = jnp.dot(h.astype(w.dtype), w, preferred_element_type=jnp.float32)
        y = y.astype(epilogue_dtype) + b_refs[l][...]     # bias in epilogue dtype
        if (l < n_layers - 1) or output_non_linearity:
            y = non_linearity_fn(y)
        h = y
    o_ref[...] = h.astype(o_ref.dtype)


def mlp_forward(x, prepared, output_non_linearity=False, non_linearity="relu"):
    """Forward pass matching MLP.forward (Linear -> act -> ... -> Linear[-> act])."""
    ws, bs, dims, dims_pad, _compute_dtype, epilogue_dtype = prepared
    n_layers = len(ws)
    B, in_size = x.shape
    assert in_size == dims[0], (in_size, dims[0])
    fp_in, fp_out = dims_pad[0], dims_pad[-1]
    out_last = dims[-1]

    kernel = functools.partial(
        _fused_mlp_kernel, n_layers=n_layers,
        output_non_linearity=output_non_linearity,
        epilogue_dtype=epilogue_dtype,
        non_linearity_fn=_NON_LINEARITIES[non_linearity])

    # ---- VMEM budget and batch-tile sizing (generation aware). ----
    budget = _vmem_budget_bytes()
    weight_bytes = (sum(int(w.size) * w.dtype.itemsize for w in ws)
                    + sum(int(b.size) * b.dtype.itemsize for b in bs))
    x_item = jnp.dtype(x.dtype).itemsize
    # Streamed per batch row: double-buffered x + out tiles plus ~2 live f32
    # activation temporaries at the widest layer.
    per_row = 2 * (fp_in + fp_out) * x_item + 2 * max(dims_pad) * 4
    # Conservatively assume the weights end up double-buffered (the Buffered(1)
    # request below removes the second copy when supported).
    avail = budget - 2 * weight_bytes
    tile_cap = max(_SUBLANE, (max(avail, 0) // per_row) // _SUBLANE * _SUBLANE)
    batch_tile = int(min(_MAX_BATCH_TILE, tile_cap))
    # TODO(synk): if 2*sum(Kp_l*Np_l)*itemsize ever exceeds the VMEM budget,
    # fall back to a K/N-tiled grid with an f32 scratch accumulator instead of
    # keeping every layer resident.

    B_pad = _round_up(max(B, _SUBLANE), _SUBLANE)
    if B_pad > batch_tile:
        tb, use_grid = batch_tile, True
    elif B_pad >= 2 * _SUBLANE:
        # Split mid-size batches into >=2 "parallel" steps so both v7x
        # TensorCores get work.
        tb, use_grid = _round_up((B_pad + 1) // 2, _SUBLANE), True
    else:
        tb, use_grid = B_pad, False
    if use_grid:
        B_pad = _round_up(B_pad, tb)

    x_pad = jnp.zeros((B_pad, fp_in), x.dtype).at[:B, :in_size].set(x)

    # Advisory cost estimate so XLA schedules neighbouring ops sensibly.
    flops = 2 * B_pad * sum(dims_pad[l] * dims_pad[l + 1] for l in range(n_layers))
    act_elems = B_pad * sum(dims_pad[l + 1] for l in range(n_layers)
                            if (l < n_layers - 1) or output_non_linearity)
    cost = pl.CostEstimate(
        flops=flops,
        transcendentals=0 if non_linearity == "relu" else act_elems,
        bytes_accessed=(B_pad * fp_in * x_item + weight_bytes
                        + B_pad * fp_out * x_item))

    out_shape = jax.ShapeDtypeStruct((B_pad, fp_out), x.dtype)

    if use_grid:
        def call_grid(weight_spec_kwargs):
            in_specs = [pl.BlockSpec((tb, fp_in), lambda i: (i, 0))]
            in_specs += [pl.BlockSpec(w.shape, lambda i: (0, 0),
                                      **weight_spec_kwargs) for w in ws]
            in_specs += [pl.BlockSpec(b.shape, lambda i: (0, 0),
                                      **weight_spec_kwargs) for b in bs]
            return pl.pallas_call(
                kernel,
                out_shape=out_shape,
                grid=(B_pad // tb,),
                in_specs=in_specs,
                out_specs=pl.BlockSpec((tb, fp_out), lambda i: (i, 0)),
                compiler_params=pltpu.CompilerParams(
                    dimension_semantics=("parallel",),  # shard batch across TCs
                    vmem_limit_bytes=budget),
                cost_estimate=cost,
            )(x_pad, *ws, *bs)

        try:
            # Weights/biases are grid-invariant: single-buffer them (the
            # second pipeline buffer for a constant index_map is pure waste).
            out_pad = call_grid(dict(pipeline_mode=pl.Buffered(1)))
        except Exception:
            out_pad = call_grid({})
    else:
        # Tiny batch: single grid-less invocation, whole arrays VMEM-resident.
        vmem = pl.BlockSpec(memory_space=pltpu.MemorySpace.VMEM)
        out_pad = pl.pallas_call(
            kernel,
            out_shape=out_shape,
            in_specs=[vmem] * (1 + 2 * n_layers),
            out_specs=vmem,
            compiler_params=pltpu.CompilerParams(vmem_limit_bytes=budget),
            cost_estimate=cost,
        )(x_pad, *ws, *bs)

    return out_pad[:B, :out_last]


def init_mlp_params(key, in_size, out_sizes, dtype=jnp.float32):
    """Deterministic init mirroring nn.Linear's default U(-1/sqrt(in), 1/sqrt(in))."""
    params = []
    in_sizes = [in_size] + list(out_sizes[:-1])
    for i, o in zip(in_sizes, out_sizes):
        key, kw, kb = jax.random.split(key, 3)
        bound = 1.0 / float(i) ** 0.5
        w = jax.random.uniform(kw, (i, o), dtype, minval=-bound, maxval=bound)
        b = jax.random.uniform(kb, (o,), dtype, minval=-bound, maxval=bound)
        params.append((w, b))
    return params


def mlp_reference(x, params, output_non_linearity=False, non_linearity="relu"):
    """Pure-JAX reference for correctness checking."""
    fn = _NON_LINEARITIES[non_linearity]
    n = len(params)
    h = x
    for idx, (w, b) in enumerate(params):
        h = h @ w + b
        if (idx < n - 1) or output_non_linearity:
            h = fn(h)
    return h


if __name__ == "__main__":
    key = jax.random.PRNGKey(0)
    k_params, k_x = jax.random.split(key)

    batch = 2
    in_size = 32
    out_sizes = [64, 32, 16]   # two hidden ReLU layers + final linear

    params = init_mlp_params(k_params, in_size, out_sizes)
    x = jax.random.normal(k_x, (batch, in_size), jnp.float32)

    # Pad/stack the parameters ONCE (hoisted out of the forward path).
    prep_f32 = prepare_mlp_params(params)                          # f32 path
    prep_bf16 = prepare_mlp_params(params, compute_dtype=jnp.bfloat16)

    # Small-batch, grid-less, f32 path.
    out = jax.block_until_ready(mlp_forward(x, prep_f32))
    ref = mlp_reference(x, params)
    assert out.shape == (batch, out_sizes[-1]), out.shape
    assert jnp.allclose(out, ref, atol=1e-5, rtol=1e-5), "f32 mismatch vs reference"

    # Output non-linearity variant.
    out_nl = jax.block_until_ready(
        mlp_forward(x, prep_f32, output_non_linearity=True))
    ref_nl = mlp_reference(x, params, output_non_linearity=True)
    assert jnp.allclose(out_nl, ref_nl, atol=1e-5, rtol=1e-5), "output-NL mismatch"

    # bf16 MXU path (f32 accumulation, bf16 epilogue).
    out_bf16 = jax.block_until_ready(mlp_forward(x, prep_bf16))
    assert jnp.allclose(out_bf16, ref, atol=5e-2, rtol=5e-2), "bf16 mismatch"

    # Larger batch exercises the batch-tiled "parallel" grid path.
    xb = jax.random.normal(jax.random.PRNGKey(1), (512, in_size), jnp.float32)
    out_b = jax.block_until_ready(mlp_forward(xb, prep_f32))
    ref_b = mlp_reference(xb, params)
    assert out_b.shape == (512, out_sizes[-1]), out_b.shape
    assert jnp.allclose(out_b, ref_b, atol=1e-4, rtol=1e-4), "batched mismatch"

    print("KERNEL_OK")
</pallas_src>

<mosaic_0001>
module attributes {stable_mosaic.version = 11 : i64} {
  func.func @_fused_mlp_kernel(%arg0: memref<8x128xf32, #tpu.memory_space<vmem>>, %arg1: memref<128x128xf32, #tpu.memory_space<vmem>>, %arg2: memref<128x128xf32, #tpu.memory_space<vmem>>, %arg3: memref<128x128xf32, #tpu.memory_space<vmem>>, %arg4: memref<1x128xf32, #tpu.memory_space<vmem>>, %arg5: memref<1x128xf32, #tpu.memory_space<vmem>>, %arg6: memref<1x128xf32, #tpu.memory_space<vmem>>, %arg7: memref<8x128xf32, #tpu.memory_space<vmem>>) attributes {dimension_semantics = [], scalar_prefetch = 0 : i64, scratch_operands = 0 : i64, tpu.core_type = #tpu.core_type<tc>} {
    %c0 = arith.constant 0 : index
    %c0_0 = arith.constant 0 : index
    %0 = vector.load %arg0[%c0, %c0_0] : memref<8x128xf32, #tpu.memory_space<vmem>>, vector<8x128xf32>
    %c0_1 = arith.constant 0 : index
    %c0_2 = arith.constant 0 : index
    %1 = vector.load %arg1[%c0_1, %c0_2] : memref<128x128xf32, #tpu.memory_space<vmem>>, vector<128x128xf32>
    %cst = arith.constant dense<0.000000e+00> : vector<8x128xf32>
    %2 = tpu.matmul %0, %1, %cst {dimension_numbers = #tpu.dot_dimension_numbers<[1], [0], [0], [1], [0, 0, 1, 1], [], []>} : vector<8x128xf32>, vector<128x128xf32>, vector<8x128xf32> -> vector<8x128xf32>
    %c0_3 = arith.constant 0 : index
    %c0_4 = arith.constant 0 : index
    %3 = vector.load %arg4[%c0_3, %c0_4] : memref<1x128xf32, #tpu.memory_space<vmem>>, vector<1x128xf32>
    %4 = vector.broadcast %3 : vector<1x128xf32> to vector<8x128xf32>
    %5 = arith.addf %2, %4 : vector<8x128xf32>
    %cst_5 = arith.constant 0.000000e+00 : f32
    %6 = vector.broadcast %cst_5 : f32 to vector<8x128xf32>
    %7 = arith.maximumf %5, %6 : vector<8x128xf32>
    %c0_6 = arith.constant 0 : index
    %c0_7 = arith.constant 0 : index
    %8 = vector.load %arg2[%c0_6, %c0_7] : memref<128x128xf32, #tpu.memory_space<vmem>>, vector<128x128xf32>
    %cst_8 = arith.constant dense<0.000000e+00> : vector<8x128xf32>
    %9 = tpu.matmul %7, %8, %cst_8 {dimension_numbers = #tpu.dot_dimension_numbers<[1], [0], [0], [1], [0, 0, 1, 1], [], []>} : vector<8x128xf32>, vector<128x128xf32>, vector<8x128xf32> -> vector<8x128xf32>
    %c0_9 = arith.constant 0 : index
    %c0_10 = arith.constant 0 : index
    %10 = vector.load %arg5[%c0_9, %c0_10] : memref<1x128xf32, #tpu.memory_space<vmem>>, vector<1x128xf32>
    %11 = vector.broadcast %10 : vector<1x128xf32> to vector<8x128xf32>
    %12 = arith.addf %9, %11 : vector<8x128xf32>
    %cst_11 = arith.constant 0.000000e+00 : f32
    %13 = vector.broadcast %cst_11 : f32 to vector<8x128xf32>
    %14 = arith.maximumf %12, %13 : vector<8x128xf32>
    %c0_12 = arith.constant 0 : index
    %c0_13 = arith.constant 0 : index
    %15 = vector.load %arg3[%c0_12, %c0_13] : memref<128x128xf32, #tpu.memory_space<vmem>>, vector<128x128xf32>
    %cst_14 = arith.constant dense<0.000000e+00> : vector<8x128xf32>
    %16 = tpu.matmul %14, %15, %cst_14 {dimension_numbers = #tpu.dot_dimension_numbers<[1], [0], [0], [1], [0, 0, 1, 1], [], []>} : vector<8x128xf32>, vector<128x128xf32>, vector<8x128xf32> -> vector<8x128xf32>
    %c0_15 = arith.constant 0 : index
    %c0_16 = arith.constant 0 : index
    %17 = vector.load %arg6[%c0_15, %c0_16] : memref<1x128xf32, #tpu.memory_space<vmem>>, vector<1x128xf32>
    %18 = vector.broadcast %17 : vector<1x128xf32> to vector<8x128xf32>
    %19 = arith.addf %16, %18 : vector<8x128xf32>
    %c0_17 = arith.constant 0 : index
    %c0_18 = arith.constant 0 : index
    %20 = vector.load %arg7[%c0_17, %c0_18] : memref<8x128xf32, #tpu.memory_space<vmem>>, vector<8x128xf32>
    tpu.vector_store %arg7[%c0_17, %c0_18], %19 {strides = array<i32>} : memref<8x128xf32, #tpu.memory_space<vmem>>, vector<8x128xf32>,
    return
  }
}

</mosaic_0001>

<llo_original>
// kernel: tpu_custom_call.1
$region0: #{tpu_custom_call.1}
  #allocation0 [shape = 'u32[]', space=smem, size = 0x4, offset = 0x4, fixed_abs, tag = 'smem constant byte address 0x4 - core index']
  #allocation1 [shape = 'u32[72,128]{1,0:T(1,128)}', space=vmem, size = 0x9000, scoped, tag = 'internal scratch']
  %s0 = inlined_call_operand.hbm [shape: f32[8,128], index: 0, kind: input, shape index: {}]
  %s1 = inlined_call_operand.hbm [shape: f32[128,128], index: 1, kind: input, shape index: {}]
  %s2 = inlined_call_operand.hbm [shape: f32[128,128], index: 2, kind: input, shape index: {}]
  %s3 = inlined_call_operand.hbm [shape: f32[128,128], index: 3, kind: input, shape index: {}]
  %s4 = inlined_call_operand.vmem [shape: f32[1,128], index: 4, kind: input, shape index: {}]
  %s5 = inlined_call_operand.vmem [shape: f32[1,128], index: 5, kind: input, shape index: {}]
  %s6 = inlined_call_operand.vmem [shape: f32[1,128], index: 6, kind: input, shape index: {}]
  %s7 = inlined_call_operand.hbm [shape: f32[8,128], index: 7, kind: output, shape index: {}]
  %s8 = sld [smem:[#allocation0]]
  $region54: #{tpu_custom_call.1} parent=0
    _
  %s10 = ssub.s32 1, %s8
  %s11 = scalar_select 0, %s10, %s8
  $region1: #{tpu_custom_call.1} parent=0
    #allocation2 [shape = 'u8[4096]{0}', space=vmem, size = 0x1000, scoped, tag = 'input window, operand 0, single buffered']
    #allocation3 [shape = 's32[1]{0}', space=sflag, size = 0x4, scoped, tag = 'scoped memory for tpu_custom_call.1']
    #allocation4 [shape = 's32[1]{0}', space=sflag, size = 0x4, scoped, tag = 'scoped memory for tpu_custom_call.1']
    #allocation5 [shape = 'u8[65536]{0}', space=vmem, size = 0x10000, scoped, tag = 'input window, operand 1, single buffered']
    #allocation6 [shape = 's32[1]{0}', space=sflag, size = 0x4, scoped, tag = 'scoped memory for tpu_custom_call.1']
    #allocation7 [shape = 'u8[65536]{0}', space=vmem, size = 0x10000, scoped, tag = 'input window, operand 2, single buffered']
    #allocation8 [shape = 'u8[65536]{0}', space=vmem, size = 0x10000, scoped, tag = 'input window, operand 3, single buffered']
    #allocation9 [shape = 's32[1]{0}', space=sflag, size = 0x4, scoped, tag = 'scoped memory for tpu_custom_call.1']
    #allocation10 [shape = 'u8[4096]{0}', space=vmem, size = 0x1000, scoped, tag = 'output window, operand 0, single buffered']
    %12 = vsyncpa [#allocation3], 0
    %13 = vsyncpa [#allocation6], 0
    %14 = vsyncpa [#allocation9], 0
    %15 = vsyncpa [#allocation4], 0
    // Predicated region
    $region2: #{tpu_custom_call.1} parent=1 // pred_check
      _
    $region3: #{tpu_custom_call.1} parent=1 // pred_check_branch
      %17 = sbr.rel (0) target = $region5
    $region4: #{tpu_custom_call.1} parent=1 // pred_region
      %19 = vsyncadd [#allocation3], 0
      %s21 = sshll.u32 %s0, 4
      %s22 = int_to_ptr.hbm [resolvable:$true] %s21
      %s23 = sshll.u32 [#allocation2], 4
      %s24 = int_to_ptr.vmem [resolvable:$true] %s23
      %26 = dma.hbm_to_vmem [thread:$0]  %s22, 128, %s24, [#allocation3]
    $region5: #{tpu_custom_call.1} parent=1 // pred_fallthru
      _
    // Predicated region
    $region6: #{tpu_custom_call.1} parent=1 // pred_check
      _
    $region7: #{tpu_custom_call.1} parent=1 // pred_check_branch
      %28 = sbr.rel (0) target = $region9
    $region8: #{tpu_custom_call.1} parent=1 // pred_region
      %30 = vsyncadd [#allocation6], 0
      %s31 = sshll.u32 %s1, 4
      %s32 = int_to_ptr.hbm [resolvable:$true] %s31
      %s33 = sshll.u32 [#allocation5], 4
      %s34 = int_to_ptr.vmem [resolvable:$true] %s33
      %39 = dma.hbm_to_vmem [thread:$0]  %s32, 2048, %s34, [#allocation6], 128, 128, 8
    $region9: #{tpu_custom_call.1} parent=1 // pred_fallthru
      _
    // Predicated region
    $region10: #{tpu_custom_call.1} parent=1 // pred_check
      _
    $region11: #{tpu_custom_call.1} parent=1 // pred_check_branch
      %41 = sbr.rel (0) target = $region13
    $region12: #{tpu_custom_call.1} parent=1 // pred_region
      %43 = vsyncadd [#allocation6], 0
      %s44 = sshll.u32 %s2, 4
      %s45 = int_to_ptr.hbm [resolvable:$true] %s44
      %s46 = sshll.u32 [#allocation7], 4
      %s47 = int_to_ptr.vmem [resolvable:$true] %s46
      %52 = dma.hbm_to_vmem [thread:$0]  %s45, 2048, %s47, [#allocation6], 128, 128, 8
    $region13: #{tpu_custom_call.1} parent=1 // pred_fallthru
      _
    // Predicated region
    $region14: #{tpu_custom_call.1} parent=1 // pred_check
      _
    $region15: #{tpu_custom_call.1} parent=1 // pred_check_branch
      %54 = sbr.rel (0) target = $region17
    $region16: #{tpu_custom_call.1} parent=1 // pred_region
      %56 = vsyncadd [#allocation9], 0
      %s57 = sshll.u32 %s3, 4
      %s58 = int_to_ptr.hbm [resolvable:$true] %s57
      %s59 = sshll.u32 [#allocation8], 4
      %s60 = int_to_ptr.vmem [resolvable:$true] %s59
      %65 = dma.hbm_to_vmem [thread:$0]  %s58, 2048, %s60, [#allocation9], 128, 128, 8
    $region17: #{tpu_custom_call.1} parent=1 // pred_fallthru
      _
    // Predicated region
    $region18: #{tpu_custom_call.1} parent=1 // pred_check
      _
    $region19: #{tpu_custom_call.1} parent=1 // pred_check_branch
      %67 = sbr.rel (0) target = $region21
    $region20: #{tpu_custom_call.1} parent=1 // pred_region
      _
    $region21: #{tpu_custom_call.1} parent=1 // pred_fallthru
      _
    // Predicated region
    $region22: #{tpu_custom_call.1} parent=1 // pred_check
      _
    $region23: #{tpu_custom_call.1} parent=1 // pred_check_branch
      %69 = sbr.rel (0) target = $region25
    $region24: #{tpu_custom_call.1} parent=1 // pred_region
      _
    $region25: #{tpu_custom_call.1} parent=1 // pred_fallthru
      _
    // Predicated region
    $region26: #{tpu_custom_call.1} parent=1 // pred_check
      _
    $region27: #{tpu_custom_call.1} parent=1 // pred_check_branch
      %71 = sbr.rel (0) target = $region29
    $region28: #{tpu_custom_call.1} parent=1 // pred_region
      _
    $region29: #{tpu_custom_call.1} parent=1 // pred_fallthru
      _
    // Predicated region
    $region30: #{tpu_custom_call.1} parent=1 // pred_check
      _
    $region31: #{tpu_custom_call.1} parent=1 // pred_check_branch
      %73 = sbr.rel (0) target = $region33
    $region32: #{tpu_custom_call.1} parent=1 // pred_region
      %75 = dma.done [#allocation3], 128
    $region33: #{tpu_custom_call.1} parent=1 // pred_fallthru
      _
    // Predicated region
    $region34: #{tpu_custom_call.1} parent=1 // pred_check
      _
    $region35: #{tpu_custom_call.1} parent=1 // pred_check_branch
      %77 = sbr.rel (0) target = $region37
    $region36: #{tpu_custom_call.1} parent=1 // pred_region
      %79 = dma.done [#allocation6], 2048
    $region37: #{tpu_custom_call.1} parent=1 // pred_fallthru
      _
    // Predicated region
    $region38: #{tpu_custom_call.1} parent=1 // pred_check
      _
    $region39: #{tpu_custom_call.1} parent=1 // pred_check_branch
      %81 = sbr.rel (0) target = $region41
    $region40: #{tpu_custom_call.1} parent=1 // pred_region
      %83 = dma.done [#allocation6], 2048
    $region41: #{tpu_custom_call.1} parent=1 // pred_fallthru
      _
    // Predicated region
    $region42: #{tpu_custom_call.1} parent=1 // pred_check
      _
    $region43: #{tpu_custom_call.1} parent=1 // pred_check_branch
      %85 = sbr.rel (0) target = $region45
    $region44: #{tpu_custom_call.1} parent=1 // pred_region
      %87 = dma.done [#allocation9], 2048
    $region45: #{tpu_custom_call.1} parent=1 // pred_fallthru
      _
    %v88 = vld [vmem:[#allocation2] sm:$0xff]
    %v89 = vld [vmem:[#allocation5] sm:$0xff]
    %v90 = vld [vmem:[#allocation5 + $0x8] sm:$0xff]
    %v91 = vld [vmem:[#allocation5 + $0x10] sm:$0xff]
    %v92 = vld [vmem:[#allocation5 + $0x18] sm:$0xff]
    %v93 = vld [vmem:[#allocation5 + $0x20] sm:$0xff]
    %v94 = vld [vmem:[#allocation5 + $0x28] sm:$0xff]
    %v95 = vld [vmem:[#allocation5 + $0x30] sm:$0xff]
    %v96 = vld [vmem:[#allocation5 + $0x38] sm:$0xff]
    %v97 = vld [vmem:[#allocation5 + $0x40] sm:$0xff]
    %v98 = vld [vmem:[#allocation5 + $0x48] sm:$0xff]
    %v99 = vld [vmem:[#allocation5 + $0x50] sm:$0xff]
    %v100 = vld [vmem:[#allocation5 + $0x58] sm:$0xff]
    %v101 = vld [vmem:[#allocation5 + $0x60] sm:$0xff]
    %v102 = vld [vmem:[#allocation5 + $0x68] sm:$0xff]
    %v103 = vld [vmem:[#allocation5 + $0x70] sm:$0xff]
    %v104 = vld [vmem:[#allocation5 + $0x78] sm:$0xff]
    %v105 = vld [vmem:[%s4] sm:$0x1]
    %v107 = vperm.slane %v105, 0
    %109 = vmatpush.msra.mxu0 %v104
    %110 = vmatpush.msra.mxu0 %v103
    %111 = vmatpush.msra.mxu0 %v102
    %112 = vmatpush.msra.mxu0 %v101
    %113 = vmatpush.msra.mxu0 %v100
    %114 = vmatpush.msra.mxu0 %v99
    %115 = vmatpush.msra.mxu0 %v98
    %116 = vmatpush.msra.mxu0 %v97
    %117 = vmatpush.msra.mxu0 %v96
    %118 = vmatpush.msra.mxu0 %v95
    %119 = vmatpush.msra.mxu0 %v94
    %120 = vmatpush.msra.mxu0 %v93
    %121 = vmatpush.msra.mxu0 %v92
    %122 = vmatpush.msra.mxu0 %v91
    %123 = vmatpush.msra.mxu0 %v90
    %124 = vmatpush.msra.mxu0 %v89
    %125 = vmatmul.f32.gmra.mxu0 %v88
    %v126 = vpop.f32.mrf.mxu0
    %v127 = vadd.f32 %v107, %v126
    %128 = vdwg.mxu0
    %v129 = vmax.f32 %v127, 0.0
    %v130 = vld [vmem:[#allocation7] sm:$0xff]
    %v131 = vld [vmem:[#allocation7 + $0x8] sm:$0xff]
    %v132 = vld [vmem:[#allocation7 + $0x10] sm:$0xff]
    %v133 = vld [vmem:[#allocation7 + $0x18] sm:$0xff]
    %v134 = vld [vmem:[#allocation7 + $0x20] sm:$0xff]
    %v135 = vld [vmem:[#allocation7 + $0x28] sm:$0xff]
    %v136 = vld [vmem:[#allocation7 + $0x30] sm:$0xff]
    %v137 = vld [vmem:[#allocation7 + $0x38] sm:$0xff]
    %v138 = vld [vmem:[#allocation7 + $0x40] sm:$0xff]
    %v139 = vld [vmem:[#allocation7 + $0x48] sm:$0xff]
    %v140 = vld [vmem:[#allocation7 + $0x50] sm:$0xff]
    %v141 = vld [vmem:[#allocation7 + $0x58] sm:$0xff]
    %v142 = vld [vmem:[#allocation7 + $0x60] sm:$0xff]
    %v143 = vld [vmem:[#allocation7 + $0x68] sm:$0xff]
    %v144 = vld [vmem:[#allocation7 + $0x70] sm:$0xff]
    %v145 = vld [vmem:[#allocation7 + $0x78] sm:$0xff]
    %v146 = vld [vmem:[%s5] sm:$0x1]
    %v148 = vperm.slane %v146, 0
    %150 = vmatpush.msra.mxu0 %v145
    %151 = vmatpush.msra.mxu0 %v144
    %152 = vmatpush.msra.mxu0 %v143
    %153 = vmatpush.msra.mxu0 %v142
    %154 = vmatpush.msra.mxu0 %v141
    %155 = vmatpush.msra.mxu0 %v140
    %156 = vmatpush.msra.mxu0 %v139
    %157 = vmatpush.msra.mxu0 %v138
    %158 = vmatpush.msra.mxu0 %v137
    %159 = vmatpush.msra.mxu0 %v136
    %160 = vmatpush.msra.mxu0 %v135
    %161 = vmatpush.msra.mxu0 %v134
    %162 = vmatpush.msra.mxu0 %v133
    %163 = vmatpush.msra.mxu0 %v132
    %164 = vmatpush.msra.mxu0 %v131
    %165 = vmatpush.msra.mxu0 %v130
    %166 = vmatmul.f32.gmra.mxu0 %v129
    %v167 = vpop.f32.mrf.mxu0
    %v168 = vadd.f32 %v148, %v167
    %169 = vdwg.mxu0
    %v170 = vmax.f32 %v168, 0.0
    %v171 = vld [vmem:[#allocation8] sm:$0xff]
    %v172 = vld [vmem:[#allocation8 + $0x8] sm:$0xff]
    %v173 = vld [vmem:[#allocation8 + $0x10] sm:$0xff]
    %v174 = vld [vmem:[#allocation8 + $0x18] sm:$0xff]
    %v175 = vld [vmem:[#allocation8 + $0x20] sm:$0xff]
    %v176 = vld [vmem:[#allocation8 + $0x28] sm:$0xff]
    %v177 = vld [vmem:[#allocation8 + $0x30] sm:$0xff]
    %v178 = vld [vmem:[#allocation8 + $0x38] sm:$0xff]
    %v179 = vld [vmem:[#allocation8 + $0x40] sm:$0xff]
    %v180 = vld [vmem:[#allocation8 + $0x48] sm:$0xff]
    %v181 = vld [vmem:[#allocation8 + $0x50] sm:$0xff]
    %v182 = vld [vmem:[#allocation8 + $0x58] sm:$0xff]
    %v183 = vld [vmem:[#allocation8 + $0x60] sm:$0xff]
    %v184 = vld [vmem:[#allocation8 + $0x68] sm:$0xff]
    %v185 = vld [vmem:[#allocation8 + $0x70] sm:$0xff]
    %v186 = vld [vmem:[#allocation8 + $0x78] sm:$0xff]
    %v187 = vld [vmem:[%s6] sm:$0x1]
    %v189 = vperm.slane %v187, 0
    %191 = vmatpush.msra.mxu0 %v186
    %192 = vmatpush.msra.mxu0 %v185
    %193 = vmatpush.msra.mxu0 %v184
    %194 = vmatpush.msra.mxu0 %v183
    %195 = vmatpush.msra.mxu0 %v182
    %196 = vmatpush.msra.mxu0 %v181
    %197 = vmatpush.msra.mxu0 %v180
    %198 = vmatpush.msra.mxu0 %v179
    %199 = vmatpush.msra.mxu0 %v178
    %200 = vmatpush.msra.mxu0 %v177
    %201 = vmatpush.msra.mxu0 %v176
    %202 = vmatpush.msra.mxu0 %v175
    %203 = vmatpush.msra.mxu0 %v174
    %204 = vmatpush.msra.mxu0 %v173
    %205 = vmatpush.msra.mxu0 %v172
    %206 = vmatpush.msra.mxu0 %v171
    %207 = vmatmul.f32.gmra.mxu0 %v170
    %v208 = vpop.f32.mrf.mxu0
    %v209 = vadd.f32 %v189, %v208
    %210 = vdwg.mxu0
    %211 = vst [vmem:[#allocation10] sm:$0xff] %v209
    // Predicated region
    $region46: #{tpu_custom_call.1} parent=1 // pred_check
      _
    $region47: #{tpu_custom_call.1} parent=1 // pred_check_branch
      %213 = sbr.rel (0) target = $region49
    $region48: #{tpu_custom_call.1} parent=1 // pred_region
      %215 = vsyncadd [#allocation4], 0
      %s217 = sshll.u32 [#allocation10], 4
      %s218 = int_to_ptr.vmem [resolvable:$true] %s217
      %s219 = sshll.u32 %s7, 4
      %s220 = int_to_ptr.hbm [resolvable:$true] %s219
      %222 = dma.vmem_to_hbm [thread:$0]  %s218, 128, %s220, [#allocation4]
    $region49: #{tpu_custom_call.1} parent=1 // pred_fallthru
      _
    // Predicated region
    $region50: #{tpu_custom_call.1} parent=1 // pred_check
      _
    $region51: #{tpu_custom_call.1} parent=1 // pred_check_branch
      %224 = sbr.rel (0) target = $region53
    $region52: #{tpu_custom_call.1} parent=1 // pred_region
      %226 = dma.done [#allocation4], 128
    $region53: #{tpu_custom_call.1} parent=1 // pred_fallthru
      _
    %227 = vsyncpa [#allocation3], 1
    %228 = vsyncpa [#allocation6], 1
    %229 = vsyncpa [#allocation9], 1
    %230 = vsyncpa [#allocation4], 1

</llo_original>
